<compile_context>
chip_gen: v7x
topology: tpu7x:2x2x1
jax: 0.10.0
libtpu: 0.0.40
codegen_flags: <defaults>
</compile_context>

<pallas_src>
import functools

import jax
import jax.numpy as jnp
import numpy as np
from jax.experimental import pallas as pl
from jax.experimental.pallas import tpu as pltpu

_PAIRWISE_EPS = 1e-6  # matches torch.nn.functional.pairwise_distance default


def _contrastive_loss_kernel(o1_ref, o2_ref, label_ref, out_ref, acc_ref, *,
                             margin, total_b):
    # o1_ref, o2_ref: [TB, D] in VMEM; label_ref: [TB, 1] in VMEM
    # out_ref: [1, 1] in SMEM; acc_ref: [1, 1] f32 SMEM running-sum scratch
    pid = pl.program_id(0)
    tb = o1_ref.shape[0]

    @pl.when(pid == 0)
    def _():
        acc_ref[0, 0] = jnp.float32(0.0)

    o1 = o1_ref[...].astype(jnp.float32)
    o2 = o2_ref[...].astype(jnp.float32)
    label = label_ref[...].astype(jnp.float32)                 # [TB, 1]

    # F.pairwise_distance: ||x1 - x2 + eps||_2 along the feature axis
    diff = o1 - o2 + _PAIRWISE_EPS                             # [TB, D]
    sq_sum = jnp.sum(diff * diff, axis=-1, keepdims=True)      # [TB, 1] == d^2
    dist = jnp.sqrt(sq_sum)                                    # [TB, 1]
    hinge = jnp.maximum(margin - dist, 0.0)                    # clamp(margin - d, 0)

    # (1 - label) * d^2 + label * hinge^2  (d^2 == sq_sum exactly; no re-square)
    per_row = (1.0 - label) * sq_sum + label * (hinge * hinge)  # [TB, 1]

    # Mask padded rows (global row index >= true batch size).
    row_idx = pid * tb + jax.lax.broadcasted_iota(jnp.int32, (tb, 1), 0)
    per_row = jnp.where(row_idx < total_b, per_row, 0.0)

    acc_ref[0, 0] += jnp.sum(per_row)

    @pl.when(pid == pl.num_programs(0) - 1)
    def _():
        out_ref[0, 0] = acc_ref[0, 0] * jnp.float32(1.0 / total_b)


def contrastive_loss(output1, output2, label, margin=2.0, tile_b=None):
    """output1, output2: [B, D]; label: [B] or [B, 1]. Returns scalar f32 loss."""
    B, D = output1.shape
    label = jnp.asarray(label).reshape(B, 1)

    if tile_b is None:
        # Budget ~24 MiB for the two double-buffered (TB, D) input tiles.
        itemsize = jnp.dtype(output1.dtype).itemsize
        bytes_per_row = 2 * 2 * D * itemsize
        tile_b = (24 * 1024 * 1024) // max(bytes_per_row, 1)
        tile_b = min(tile_b, 1024)
    # Never bigger than the (sublane-rounded) batch, multiple of 8, >= 8.
    tile_b = min(int(tile_b), ((B + 7) // 8) * 8)
    tile_b = max(8, (tile_b // 8) * 8)

    n_tiles = pl.cdiv(B, tile_b)
    b_pad = n_tiles * tile_b
    if b_pad != B:
        pad = b_pad - B
        output1 = jnp.pad(output1, ((0, pad), (0, 0)))
        output2 = jnp.pad(output2, ((0, pad), (0, 0)))
        label = jnp.pad(label, ((0, pad), (0, 0)))

    kernel = functools.partial(_contrastive_loss_kernel,
                               margin=float(margin), total_b=int(B))
    out = pl.pallas_call(
        kernel,
        out_shape=jax.ShapeDtypeStruct((1, 1), jnp.float32),
        grid=(n_tiles,),
        in_specs=[
            pl.BlockSpec((tile_b, D), lambda i: (i, 0)),   # output1 tile
            pl.BlockSpec((tile_b, D), lambda i: (i, 0)),   # output2 tile
            pl.BlockSpec((tile_b, 1), lambda i: (i, 0)),   # label tile
        ],
        out_specs=pl.BlockSpec((1, 1), lambda i: (0, 0),
                               memory_space=pltpu.SMEM),
        scratch_shapes=[pltpu.SMEM((1, 1), jnp.float32)],
        compiler_params=pltpu.CompilerParams(
            dimension_semantics=("arbitrary",),   # reduction over batch tiles
            vmem_limit_bytes=48 * 1024 * 1024,    # safe on v7x's 64 MiB VMEM
        ),
    )(output1, output2, label)
    return out[0, 0]


def _reference_loss(output1, output2, label, margin=2.0):
    # Pure-JAX reference mirroring the PyTorch semantics.
    diff = output1.astype(jnp.float32) - output2.astype(jnp.float32) + _PAIRWISE_EPS
    dist = jnp.sqrt(jnp.sum(diff * diff, axis=-1, keepdims=True))
    hinge = jnp.maximum(margin - dist, 0.0)
    label = jnp.asarray(label).reshape(-1, 1).astype(jnp.float32)
    return jnp.mean((1.0 - label) * dist**2 + label * hinge**2)


if __name__ == "__main__":
    key = jax.random.PRNGKey(0)

    # Case 1: small shapes matching the Siamese-net demo (single tile).
    # Note: at this size the fixed pallas_call/grid-step overhead dominates; the
    # kernel only pays off for large B*D — kept small here for a quick check.
    k1, k2, k3, k4, k5, k6 = jax.random.split(key, 6)
    B, D = 8, 32
    o1 = jax.random.normal(k1, (B, D), dtype=jnp.float32)
    o2 = jax.random.normal(k2, (B, D), dtype=jnp.float32)
    lbl = jax.random.bernoulli(k3, p=0.5, shape=(B, 1)).astype(jnp.float32)

    loss = jax.block_until_ready(contrastive_loss(o1, o2, lbl, margin=2.0))
    ref = _reference_loss(o1, o2, lbl, margin=2.0)
    np.testing.assert_allclose(np.asarray(loss), np.asarray(ref),
                               rtol=1e-5, atol=1e-5)

    # Case 2: multi-tile grid with a ragged last tile (exercises the masked
    # accumulation path).
    B2, D2 = 300, 128
    o1b = jax.random.normal(k4, (B2, D2), dtype=jnp.float32)
    o2b = jax.random.normal(k5, (B2, D2), dtype=jnp.float32)
    lblb = jax.random.bernoulli(k6, p=0.5, shape=(B2, 1)).astype(jnp.float32)

    loss2 = jax.block_until_ready(
        contrastive_loss(o1b, o2b, lblb, margin=2.0, tile_b=128))
    ref2 = _reference_loss(o1b, o2b, lblb, margin=2.0)
    np.testing.assert_allclose(np.asarray(loss2), np.asarray(ref2),
                               rtol=1e-5, atol=1e-5)

    print("KERNEL_OK")
</pallas_src>

<mosaic_0001>
module attributes {stable_mosaic.version = 11 : i64} {
  func.func @_contrastive_loss_kernel(%arg0: i32, %arg1: memref<8x32xf32, #tpu.memory_space<vmem>>, %arg2: memref<8x32xf32, #tpu.memory_space<vmem>>, %arg3: memref<8x1xf32, #tpu.memory_space<vmem>>, %arg4: memref<1x1xf32, #tpu.memory_space<smem>>, %arg5: memref<1x1xf32, #tpu.memory_space<smem>>) attributes {dimension_semantics = [#tpu.dimension_semantics<arbitrary>], iteration_bounds = array<i64: 1>, scalar_prefetch = 0 : i64, scratch_operands = 1 : i64, tpu.core_type = #tpu.core_type<tc>, window_params = [{transform_indices = @transform_0, window_bounds = array<i64: 8, 32>}, {transform_indices = @transform_1, window_bounds = array<i64: 8, 32>}, {transform_indices = @transform_2, window_bounds = array<i64: 8, 1>}, {transform_indices = @transform_3, window_bounds = array<i64: 1, 1>}]} {
    %c0_i32 = arith.constant 0 : i32
    %0 = arith.cmpi eq, %arg0, %c0_i32 : i32
    %1 = arith.extui %0 : i1 to i32
    %c0_i32_0 = arith.constant 0 : i32
    %2 = arith.cmpi ne, %1, %c0_i32_0 : i32
    scf.if %2 {
      %cst_19 = arith.constant 0.000000e+00 : f32
      %c0_20 = arith.constant 0 : index
      %c0_21 = arith.constant 0 : index
      %41 = memref.load %arg5[%c0_20, %c0_21] : memref<1x1xf32, #tpu.memory_space<smem>>
      memref.store %cst_19, %arg5[%c0_20, %c0_21] : memref<1x1xf32, #tpu.memory_space<smem>>
    } else {
    }
    %c0 = arith.constant 0 : index
    %c0_1 = arith.constant 0 : index
    %3 = vector.load %arg1[%c0, %c0_1] : memref<8x32xf32, #tpu.memory_space<vmem>>, vector<8x32xf32>
    %c0_2 = arith.constant 0 : index
    %c0_3 = arith.constant 0 : index
    %4 = vector.load %arg2[%c0_2, %c0_3] : memref<8x32xf32, #tpu.memory_space<vmem>>, vector<8x32xf32>
    %c0_4 = arith.constant 0 : index
    %c0_5 = arith.constant 0 : index
    %5 = vector.load %arg3[%c0_4, %c0_5] : memref<8x1xf32, #tpu.memory_space<vmem>>, vector<8x1xf32>
    %6 = arith.subf %3, %4 : vector<8x32xf32>
    %cst = arith.constant 9.99999997E-7 : f32
    %7 = vector.broadcast %cst : f32 to vector<8x32xf32>
    %8 = arith.addf %6, %7 : vector<8x32xf32>
    %9 = arith.mulf %8, %8 : vector<8x32xf32>
    %cst_6 = arith.constant dense<0.000000e+00> : vector<8xf32>
    %10 = vector.multi_reduction <add>, %9, %cst_6 [1] : vector<8x32xf32> to vector<8xf32>
    %11 = vector.shape_cast %10 : vector<8xf32> to vector<8x1xf32>
    %12 = math.sqrt %11 : vector<8x1xf32>
    %cst_7 = arith.constant 2.000000e+00 : f32
    %13 = vector.broadcast %cst_7 : f32 to vector<8x1xf32>
    %14 = arith.subf %13, %12 : vector<8x1xf32>
    %cst_8 = arith.constant 0.000000e+00 : f32
    %15 = vector.broadcast %cst_8 : f32 to vector<8x1xf32>
    %16 = arith.maximumf %14, %15 : vector<8x1xf32>
    %cst_9 = arith.constant 1.000000e+00 : f32
    %17 = vector.broadcast %cst_9 : f32 to vector<8x1xf32>
    %18 = arith.subf %17, %5 : vector<8x1xf32>
    %19 = arith.mulf %18, %11 : vector<8x1xf32>
    %20 = arith.mulf %16, %16 : vector<8x1xf32>
    %21 = arith.mulf %5, %20 : vector<8x1xf32>
    %22 = arith.addf %19, %21 : vector<8x1xf32>
    %c8_i32 = arith.constant 8 : i32
    %23 = arith.muli %arg0, %c8_i32 : i32
    %24 = tpu.iota {dimensions = array<i32: 0>} : vector<8x1xi32>
    %25 = vector.broadcast %23 : i32 to vector<8x1xi32>
    %26 = arith.addi %25, %24 : vector<8x1xi32>
    %c8_i32_10 = arith.constant 8 : i32
    %27 = vector.broadcast %c8_i32_10 : i32 to vector<8x1xi32>
    %28 = arith.cmpi slt, %26, %27 : vector<8x1xi32>
    %cst_11 = arith.constant 0.000000e+00 : f32
    %29 = vector.broadcast %cst_11 : f32 to vector<8x1xf32>
    %30 = arith.select %28, %22, %29 : vector<8x1xi1>, vector<8x1xf32>
    %c0_12 = arith.constant 0 : index
    %c0_13 = arith.constant 0 : index
    %31 = memref.load %arg5[%c0_12, %c0_13] : memref<1x1xf32, #tpu.memory_space<smem>>
    %32 = vector.shape_cast %30 : vector<8x1xf32> to vector<1x8x1xf32>
    %cst_14 = arith.constant dense<0.000000e+00> : vector<1xf32>
    %33 = vector.multi_reduction <add>, %32, %cst_14 [1, 2] : vector<1x8x1xf32> to vector<1xf32>
    %34 = vector.shape_cast %33 : vector<1xf32> to vector<1x1x1xf32>
    %35 = vector.extract %34[0, 0, 0] : f32 from vector<1x1x1xf32>
    %36 = arith.addf %31, %35 : f32
    %c0_15 = arith.constant 0 : index
    %c0_16 = arith.constant 0 : index
    %37 = memref.load %arg5[%c0_15, %c0_16] : memref<1x1xf32, #tpu.memory_space<smem>>
    memref.store %36, %arg5[%c0_15, %c0_16] : memref<1x1xf32, #tpu.memory_space<smem>>
    %c0_i32_17 = arith.constant 0 : i32
    %38 = arith.cmpi eq, %arg0, %c0_i32_17 : i32
    %39 = arith.extui %38 : i1 to i32
    %c0_i32_18 = arith.constant 0 : i32
    %40 = arith.cmpi ne, %39, %c0_i32_18 : i32
    scf.if %40 {
      %c0_19 = arith.constant 0 : index
      %c0_20 = arith.constant 0 : index
      %41 = memref.load %arg5[%c0_19, %c0_20] : memref<1x1xf32, #tpu.memory_space<smem>>
      %cst_21 = arith.constant 1.250000e-01 : f32
      %42 = arith.mulf %41, %cst_21 : f32
      %c0_22 = arith.constant 0 : index
      %c0_23 = arith.constant 0 : index
      %43 = memref.load %arg4[%c0_22, %c0_23] : memref<1x1xf32, #tpu.memory_space<smem>>
      memref.store %42, %arg4[%c0_22, %c0_23] : memref<1x1xf32, #tpu.memory_space<smem>>
    } else {
    }
    return
  }
  func.func @transform_0(%arg0: i32) -> (i32, i32) {
    %c0_i32 = arith.constant 0 : i32
    %c0_i32_0 = arith.constant 0 : i32
    return %arg0, %c0_i32 : i32, i32
  }
  func.func @transform_1(%arg0: i32) -> (i32, i32) {
    %c0_i32 = arith.constant 0 : i32
    %c0_i32_0 = arith.constant 0 : i32
    return %arg0, %c0_i32 : i32, i32
  }
  func.func @transform_2(%arg0: i32) -> (i32, i32) {
    %c0_i32 = arith.constant 0 : i32
    %c0_i32_0 = arith.constant 0 : i32
    return %arg0, %c0_i32 : i32, i32
  }
  func.func @transform_3(%arg0: i32) -> (i32, i32) {
    %c0_i32 = arith.constant 0 : i32
    %c0_i32_0 = arith.constant 0 : i32
    %c0_i32_1 = arith.constant 0 : i32
    return %c0_i32, %c0_i32_0 : i32, i32
  }
}

</mosaic_0001>

<llo_original>
// kernel: tpu_custom_call.1
$region0: #{tpu_custom_call.1}
  #allocation0 [shape = 'u32[]', space=smem, size = 0x4, offset = 0x4, fixed_abs, tag = 'smem constant byte address 0x4 - core index']
  #allocation1 [shape = 'u32[144,128]{1,0:T(1,128)}', space=vmem, size = 0x12000, scoped, tag = 'internal scratch']
  #allocation2 [shape = 'f32[1,1]{1,0:T(1,128)}', space=smem, size = 0x200, scoped, tag = 'scratch operand']
  %s0 = inlined_call_operand.vmem [shape: f32[8,32], index: 0, kind: input, shape index: {}]
  %s1 = inlined_call_operand.hbm [shape: f32[8,32], index: 1, kind: input, shape index: {}]
  %s2 = inlined_call_operand.vmem [shape: f32[8,1], index: 2, kind: input, shape index: {}]
  %s3 = inlined_call_operand.hbm [shape: f32[1,1], index: 3, kind: output, shape index: {}]
  %s4 = sld [smem:[#allocation0]]
  $region34: #{tpu_custom_call.1} parent=0
    _
  %s6 = ssub.s32 1, %s4
  %s7 = scalar_select 0, %s6, %s4
  $region1: #{tpu_custom_call.1} parent=0
    #allocation3 [shape = 'u8[4096]{0}', space=vmem, size = 0x1000, scoped, tag = 'input window, operand 1, single buffered']
    #allocation4 [shape = 's32[1]{0}', space=sflag, size = 0x4, scoped, tag = 'scoped memory for tpu_custom_call.1']
    #allocation5 [shape = 's32[1]{0}', space=sflag, size = 0x4, scoped, tag = 'scoped memory for tpu_custom_call.1']
    #allocation6 [shape = 'u8[512]{0}', space=smem, size = 0x200, scoped, tag = 'output window, operand 0, single buffered']
    %8 = vsyncpa [#allocation4], 0
    %9 = vsyncpa [#allocation5], 0
    // Predicated region
    $region2: #{tpu_custom_call.1} parent=1 // pred_check
      _
    $region3: #{tpu_custom_call.1} parent=1 // pred_check_branch
      %11 = sbr.rel (0) target = $region5
    $region4: #{tpu_custom_call.1} parent=1 // pred_region
      _
    $region5: #{tpu_custom_call.1} parent=1 // pred_fallthru
      _
    // Predicated region
    $region6: #{tpu_custom_call.1} parent=1 // pred_check
      _
    $region7: #{tpu_custom_call.1} parent=1 // pred_check_branch
      %13 = sbr.rel (0) target = $region9
    $region8: #{tpu_custom_call.1} parent=1 // pred_region
      %s15 = ssub.s32 128, 128
      %16 = vsyncadd [#allocation4], %s15
      %s18 = sshll.u32 [#allocation3], 4
      %s19 = int_to_ptr.vmem [resolvable:$true] %s18
      %21 = dma.hbm_to_vmem [thread:$0]  %s1, 128, %s19, [#allocation4]
    $region9: #{tpu_custom_call.1} parent=1 // pred_fallthru
      _
    // Predicated region
    $region10: #{tpu_custom_call.1} parent=1 // pred_check
      _
    $region11: #{tpu_custom_call.1} parent=1 // pred_check_branch
      %23 = sbr.rel (0) target = $region13
    $region12: #{tpu_custom_call.1} parent=1 // pred_region
      _
    $region13: #{tpu_custom_call.1} parent=1 // pred_fallthru
      _
    // Predicated region
    $region14: #{tpu_custom_call.1} parent=1 // pred_check
      _
    $region15: #{tpu_custom_call.1} parent=1 // pred_check_branch
      %25 = sbr.rel (0) target = $region17
    $region16: #{tpu_custom_call.1} parent=1 // pred_region
      %26 = dma.done [#allocation4], 128
    $region17: #{tpu_custom_call.1} parent=1 // pred_fallthru
      _
    %p27 = scmp.eq.s32.totalorder 0, 0
    // Predicated region
    $region18: #{tpu_custom_call.1} parent=1 // pred_check
      %p28 = pneg %p27
    $region19: #{tpu_custom_call.1} parent=1 // pred_check_branch
      %30 = sbr.rel (%p28) target = $region21
    $region20: #{tpu_custom_call.1} parent=1 // pred_region
      %s31 = scalar_lea.smem [#allocation2], 0
      %32 = sst [smem:[%s31]] 0.0
    $region21: #{tpu_custom_call.1} parent=1 // pred_fallthru
      _
    %v33 = vld [vmem:[%s0] sm:$0xff]
    %v34 = vld [vmem:[#allocation3] sm:$0xff]
    %v35 = vld [vmem:[%s2] sm:$0xff]
    %v36 = vsub.f32 %v33, %v34
    %v37 = vadd.f32 %v36, 1e-06
    %v38 = vmul.f32 %v37, %v37
    %vm39 = vcmask 261120
    %v40 = vsel %vm39, %v38, 0.0
    %41 = vadd.xlane.f32.xlu0 %v40
    %v42 = vpop.xlane.xlu0 %41
    %v43 = vrsqrt.pop %v42
    %v44 = vmul.f32 %v42, %v43
    %vm45 = vcmp.eq.f32.partialorder %v42, inf
    %v46 = vsel %vm45, %v42, %v44
    %vm47 = vcmp.eq.f32.partialorder %v42, 0.0
    %v48 = vand.u32 %v42, 2147483648
    %v49 = vsel %vm47, %v48, %v46
    %v50 = vsub.f32 2.0, %v49
    %v51 = vmax.f32 %v50, 0.0
    %v52 = vsub.f32 1.0, %v35
    %v53 = vmul.f32 %v52, %v42
    %v54 = vmul.f32 %v51, %v51
    %v55 = vmul.f32 %v35, %v54
    %v56 = vadd.f32 %v53, %v55
    %s57 = smul.u32 0, 8
    %v58 = vlaneseq
    %v59 = vshrl.u32 %v58, 7
    %v60 = vstv %s57
    %v61 = vadd.s32 %v60, %v59
    %vm62 = vcmp.lt.s32.totalorder %v61, 8
    %v63 = vsel %vm62, %v56, 0.0
    %s64 = sld [smem:[#allocation2]]
    %vm65 = vcmask 7168
    %v66 = vsel %vm65, %v63, 0.0
    %67 = vadd.xlane.f32.xlu0 %v66
    %v68 = vpop.xlane.xlu0 %67
    %v69 = vrot.slane %v68, 4
    %v70 = vadd.f32 %v68, %v69
    %v71 = vrot.slane %v70, 2
    %v72 = vadd.f32 %v70, %v71
    %v73 = vrot.slane %v72, 1
    %v74 = vadd.f32 %v72, %v73
    %s75 = vtos %v74
    %s76 = sadd.f32 %s64, %s75
    %s77 = scalar_lea.smem [#allocation2], 0
    %78 = sst [smem:[%s77]] %s76
    // Predicated region
    $region22: #{tpu_custom_call.1} parent=1 // pred_check
      %p79 = pneg %p27
    $region23: #{tpu_custom_call.1} parent=1 // pred_check_branch
      %81 = sbr.rel (%p79) target = $region25
    $region24: #{tpu_custom_call.1} parent=1 // pred_region
      %s82 = sld [smem:[#allocation2]]
      %s83 = smul.f32 %s82, 0.125
      %s84 = scalar_lea.smem [#allocation6], 0
      %85 = sst [smem:[%s84]] %s83
    $region25: #{tpu_custom_call.1} parent=1 // pred_fallthru
      _
    // Predicated region
    $region26: #{tpu_custom_call.1} parent=1 // pred_check
      _
    $region27: #{tpu_custom_call.1} parent=1 // pred_check_branch
      %87 = sbr.rel (0) target = $region29
    $region28: #{tpu_custom_call.1} parent=1 // pred_region
      %s89 = ssub.s32 16, 16
      %90 = vsyncadd [#allocation5], %s89
      %93 = dma.smem_to_hbm [#allocation6], 16, %s3, [#allocation5]
    $region29: #{tpu_custom_call.1} parent=1 // pred_fallthru
      _
    // Predicated region
    $region30: #{tpu_custom_call.1} parent=1 // pred_check
      _
    $region31: #{tpu_custom_call.1} parent=1 // pred_check_branch
      %95 = sbr.rel (0) target = $region33
    $region32: #{tpu_custom_call.1} parent=1 // pred_region
      %96 = dma.done [#allocation5], 16
    $region33: #{tpu_custom_call.1} parent=1 // pred_fallthru
      _
    %97 = sfence
    %98 = vsyncpa [#allocation4], 1
    %99 = vsyncpa [#allocation5], 1

</llo_original>
